<compile_context>
chip_gen: v7x
topology: tpu7x:2x2x1
jax: 0.10.0
libtpu: 0.0.40
codegen_flags: <defaults>
</compile_context>

<pallas_src>
import jax
import jax.numpy as jnp
from jax.experimental import pallas as pl
from jax.experimental.pallas import tpu as pltpu


# -------------------- configuration (shapes implied by the module) -----------
HEIGHT = 16
WIDTH = 16
COLOR_CHANNEL = 4
HIDDEN_DIM = 32
LATENT_DIM = 8
LATENT_PAD = 128                               # lane-dense latent output width
BATCH = 2
IN_DIM = HEIGHT * WIDTH * COLOR_CHANNEL        # 1024


def _round_up(n, m):
    return ((n + m - 1) // m) * m


# -------------------- Pallas kernel -----------------------------------------
def ae_kernel(x_ref,
              w1_ref, b1_ref,      # encoder linear 1: (D, hidden) bf16, (1, hidden) f32
              w2_ref, b2_ref,      # encoder linear 2: (hidden, LATENT_PAD) bf16, (1, LATENT_PAD) f32
              w3_ref, b3_ref,      # decoder linear 1: (LATENT_PAD, hidden) bf16, (1, hidden) f32
              w4_ref, b4_ref,      # decoder linear 2: (hidden, D) bf16, (1, D) f32
              out_ref, lat_ref):
    x = x_ref[...]                                                    # (TB, D) bf16

    # ----- encoder -----
    h1 = jnp.dot(x, w1_ref[...], preferred_element_type=jnp.float32) + b1_ref[...]
    h1 = jnp.maximum(h1, 0.0)                                         # ReLU (f32 on VPU)
    # Dropout -> identity (inference).
    lat = jnp.dot(h1.astype(jnp.bfloat16), w2_ref[...],
                  preferred_element_type=jnp.float32) + b2_ref[...]
    lat = jnp.maximum(lat, 0.0)                # (TB, LATENT_PAD); cols >= LATENT_DIM are 0

    # ----- decoder -----
    h2 = jnp.dot(lat.astype(jnp.bfloat16), w3_ref[...],
                 preferred_element_type=jnp.float32) + b3_ref[...]
    h2 = jnp.maximum(h2, 0.0)                                         # ReLU
    # Dropout -> identity (inference).
    logits = jnp.dot(h2.astype(jnp.bfloat16), w4_ref[...],
                     preferred_element_type=jnp.float32) + b4_ref[...]
    # sigmoid: exp on EUP, approximate reciprocal on EUP (frees VALU slots)
    out = pl.reciprocal(1.0 + jnp.exp(-logits), approx=True)

    out_ref[...] = out.astype(out_ref.dtype)
    lat_ref[...] = lat.astype(lat_ref.dtype)


# -------------------- wrapper -------------------------------------------------
@jax.jit
def ae_forward(x_nchw, params):
    """x_nchw: (B, C, H, W) float32 -> (output (B, C, H, W), latent (B, LATENT_DIM))."""
    w1, b1, w2, b2, w3, b3, w4, b4 = params
    B = x_nchw.shape[0]
    x_flat = x_nchw.reshape(B, -1)                                    # (B, D)

    # Pad batch to a sublane multiple; tile at <=128 rows (fills MXU rows, enables grid).
    TB = min(128, _round_up(B, 8))
    B_pad = _round_up(B, TB)
    x_pad = jnp.pad(x_flat, ((0, B_pad - B), (0, 0))).astype(jnp.bfloat16)

    # Lane-dense latent: zero-pad latent dim to LATENT_PAD in w2/b2 (cols) and w3 (rows).
    w2p = jnp.pad(w2, ((0, 0), (0, LATENT_PAD - LATENT_DIM)))
    b2p = jnp.pad(b2, ((0, 0), (0, LATENT_PAD - LATENT_DIM)))
    w3p = jnp.pad(w3, ((0, LATENT_PAD - LATENT_DIM), (0, 0)))

    # bf16 MXU operands (accumulation stays f32 in the kernel).
    w1b = w1.astype(jnp.bfloat16)
    w2b = w2p.astype(jnp.bfloat16)
    w3b = w3p.astype(jnp.bfloat16)
    w4b = w4.astype(jnp.bfloat16)

    grid = (B_pad // TB,)
    batch_map = lambda i: (i, 0)
    const_map = lambda i: (0, 0)

    flops = 2 * B_pad * (IN_DIM * HIDDEN_DIM + HIDDEN_DIM * LATENT_PAD
                         + LATENT_PAD * HIDDEN_DIM + HIDDEN_DIM * IN_DIM)
    bytes_accessed = (
        x_pad.size * 2
        + (w1b.size + w2b.size + w3b.size + w4b.size) * 2
        + (b1.size + b2p.size + b3.size + b4.size) * 4
        + (B_pad * IN_DIM + B_pad * LATENT_PAD) * 4
    )

    out_pad, lat_pad = pl.pallas_call(
        ae_kernel,
        grid=grid,
        in_specs=[
            pl.BlockSpec((TB, IN_DIM), batch_map),                 # x tile
            pl.BlockSpec((IN_DIM, HIDDEN_DIM), const_map),         # w1 (resident)
            pl.BlockSpec((1, HIDDEN_DIM), const_map),              # b1
            pl.BlockSpec((HIDDEN_DIM, LATENT_PAD), const_map),     # w2 (padded)
            pl.BlockSpec((1, LATENT_PAD), const_map),              # b2 (padded)
            pl.BlockSpec((LATENT_PAD, HIDDEN_DIM), const_map),     # w3 (padded)
            pl.BlockSpec((1, HIDDEN_DIM), const_map),              # b3
            pl.BlockSpec((HIDDEN_DIM, IN_DIM), const_map),         # w4
            pl.BlockSpec((1, IN_DIM), const_map),                  # b4
        ],
        out_specs=(
            pl.BlockSpec((TB, IN_DIM), batch_map),                 # reconstruction tile
            pl.BlockSpec((TB, LATENT_PAD), batch_map),             # lane-dense latent tile
        ),
        out_shape=(
            jax.ShapeDtypeStruct((B_pad, IN_DIM), jnp.float32),
            jax.ShapeDtypeStruct((B_pad, LATENT_PAD), jnp.float32),
        ),
        compiler_params=pltpu.CompilerParams(
            dimension_semantics=("parallel",)),                    # 2x on v7x's 2 TCs
        cost_estimate=pl.CostEstimate(flops=flops,
                                      transcendentals=2 * B_pad * IN_DIM,
                                      bytes_accessed=bytes_accessed),
    )(x_pad, w1b, b1, w2b, b2p, w3b, b3, w4b, b4)

    output = out_pad[:B].reshape(B, COLOR_CHANNEL, HEIGHT, WIDTH)
    latent = lat_pad[:B, :LATENT_DIM]
    return output, latent


# -------------------- deterministic parameter init ---------------------------
def init_params(key):
    """Mimics torch.nn.Linear default init (uniform(+-1/sqrt(fan_in))).
    Weights stored as (in_features, out_features); biases as (1, out_features)."""
    def linear(k, fan_in, fan_out):
        kw, kb = jax.random.split(k)
        bound = 1.0 / jnp.sqrt(fan_in)
        w = jax.random.uniform(kw, (fan_in, fan_out), jnp.float32, -bound, bound)
        b = jax.random.uniform(kb, (1, fan_out), jnp.float32, -bound, bound)
        return w, b

    k1, k2, k3, k4 = jax.random.split(key, 4)
    w1, b1 = linear(k1, IN_DIM, HIDDEN_DIM)        # encoder Linear 1
    w2, b2 = linear(k2, HIDDEN_DIM, LATENT_DIM)    # encoder Linear 2
    w3, b3 = linear(k3, LATENT_DIM, HIDDEN_DIM)    # decoder Linear 1
    w4, b4 = linear(k4, HIDDEN_DIM, IN_DIM)        # decoder Linear 2
    return (w1, b1, w2, b2, w3, b3, w4, b4)


# -------------------- reference (plain f32 JAX) for sanity --------------------
def ae_reference(x_nchw, params):
    w1, b1, w2, b2, w3, b3, w4, b4 = params
    B = x_nchw.shape[0]
    x = x_nchw.reshape(B, -1)
    h1 = jnp.maximum(x @ w1 + b1, 0.0)
    lat = jnp.maximum(h1 @ w2 + b2, 0.0)
    h2 = jnp.maximum(lat @ w3 + b3, 0.0)
    out = jax.nn.sigmoid(h2 @ w4 + b4)
    return out.reshape(B, COLOR_CHANNEL, HEIGHT, WIDTH), lat


if __name__ == "__main__":
    key = jax.random.PRNGKey(0)
    k_x, k_p = jax.random.split(key)

    x = jax.random.uniform(k_x, (BATCH, COLOR_CHANNEL, HEIGHT, WIDTH), jnp.float32)
    params = init_params(k_p)

    output, latent = ae_forward(x, params)
    jax.block_until_ready((output, latent))

    ref_out, ref_lat = ae_reference(x, params)
    assert output.shape == (BATCH, COLOR_CHANNEL, HEIGHT, WIDTH)
    assert latent.shape == (BATCH, LATENT_DIM)
    # bf16 MXU operands + approx reciprocal -> compare against the f32 reference
    # with a correspondingly loosened tolerance.
    assert jnp.allclose(output, ref_out, atol=2e-2, rtol=2e-2), (
        float(jnp.max(jnp.abs(output - ref_out))))
    assert jnp.allclose(latent, ref_lat, atol=2e-2, rtol=2e-2), (
        float(jnp.max(jnp.abs(latent - ref_lat))))

    print("KERNEL_OK")
</pallas_src>

<mosaic_0001>
module attributes {stable_mosaic.version = 11 : i64} {
  func.func @ae_kernel(%arg0: i32, %arg1: memref<8x1024xbf16, #tpu.memory_space<vmem>>, %arg2: memref<1024x32xbf16, #tpu.memory_space<vmem>>, %arg3: memref<1x32xf32, #tpu.memory_space<vmem>>, %arg4: memref<32x128xbf16, #tpu.memory_space<vmem>>, %arg5: memref<1x128xf32, #tpu.memory_space<vmem>>, %arg6: memref<128x32xbf16, #tpu.memory_space<vmem>>, %arg7: memref<1x32xf32, #tpu.memory_space<vmem>>, %arg8: memref<32x1024xbf16, #tpu.memory_space<vmem>>, %arg9: memref<1x1024xf32, #tpu.memory_space<vmem>>, %arg10: memref<8x1024xf32, #tpu.memory_space<vmem>>, %arg11: memref<8x128xf32, #tpu.memory_space<vmem>>) attributes {dimension_semantics = [#tpu.dimension_semantics<parallel>], iteration_bounds = array<i64: 1>, scalar_prefetch = 0 : i64, scratch_operands = 0 : i64, tpu.core_type = #tpu.core_type<tc>, window_params = [{transform_indices = @transform_0, window_bounds = array<i64: 8, 1024>}, {pipeline_mode = #tpu.pipeline_mode<synchronous>, transform_indices = @transform_1, window_bounds = array<i64: 1024, 32>}, {pipeline_mode = #tpu.pipeline_mode<synchronous>, transform_indices = @transform_2, window_bounds = array<i64: 1, 32>}, {pipeline_mode = #tpu.pipeline_mode<synchronous>, transform_indices = @transform_3, window_bounds = array<i64: 32, 128>}, {pipeline_mode = #tpu.pipeline_mode<synchronous>, transform_indices = @transform_4, window_bounds = array<i64: 1, 128>}, {pipeline_mode = #tpu.pipeline_mode<synchronous>, transform_indices = @transform_5, window_bounds = array<i64: 128, 32>}, {pipeline_mode = #tpu.pipeline_mode<synchronous>, transform_indices = @transform_6, window_bounds = array<i64: 1, 32>}, {pipeline_mode = #tpu.pipeline_mode<synchronous>, transform_indices = @transform_7, window_bounds = array<i64: 32, 1024>}, {pipeline_mode = #tpu.pipeline_mode<synchronous>, transform_indices = @transform_8, window_bounds = array<i64: 1, 1024>}, {transform_indices = @transform_9, window_bounds = array<i64: 8, 1024>}, {transform_indices = @transform_10, window_bounds = array<i64: 8, 128>}]} {
    %c0 = arith.constant 0 : index
    %c0_0 = arith.constant 0 : index
    %0 = vector.load %arg1[%c0, %c0_0] : memref<8x1024xbf16, #tpu.memory_space<vmem>>, vector<8x1024xbf16>
    %c0_1 = arith.constant 0 : index
    %c0_2 = arith.constant 0 : index
    %1 = vector.load %arg2[%c0_1, %c0_2] : memref<1024x32xbf16, #tpu.memory_space<vmem>>, vector<1024x32xbf16>
    %cst = arith.constant dense<0.000000e+00> : vector<8x32xf32>
    %2 = tpu.matmul %0, %1, %cst {dimension_numbers = #tpu.dot_dimension_numbers<[1], [0], [0], [1], [0, 0, 1, 1], [], []>} : vector<8x1024xbf16>, vector<1024x32xbf16>, vector<8x32xf32> -> vector<8x32xf32>
    %c0_3 = arith.constant 0 : index
    %c0_4 = arith.constant 0 : index
    %3 = vector.load %arg3[%c0_3, %c0_4] : memref<1x32xf32, #tpu.memory_space<vmem>>, vector<1x32xf32>
    %4 = vector.broadcast %3 : vector<1x32xf32> to vector<8x32xf32>
    %5 = arith.addf %2, %4 : vector<8x32xf32>
    %cst_5 = arith.constant 0.000000e+00 : f32
    %6 = vector.broadcast %cst_5 : f32 to vector<8x32xf32>
    %7 = arith.maximumf %5, %6 : vector<8x32xf32>
    %8 = arith.truncf %7 : vector<8x32xf32> to vector<8x32xbf16>
    %c0_6 = arith.constant 0 : index
    %c0_7 = arith.constant 0 : index
    %9 = vector.load %arg4[%c0_6, %c0_7] : memref<32x128xbf16, #tpu.memory_space<vmem>>, vector<32x128xbf16>
    %cst_8 = arith.constant dense<0.000000e+00> : vector<8x128xf32>
    %10 = tpu.matmul %8, %9, %cst_8 {dimension_numbers = #tpu.dot_dimension_numbers<[1], [0], [0], [1], [0, 0, 1, 1], [], []>} : vector<8x32xbf16>, vector<32x128xbf16>, vector<8x128xf32> -> vector<8x128xf32>
    %c0_9 = arith.constant 0 : index
    %c0_10 = arith.constant 0 : index
    %11 = vector.load %arg5[%c0_9, %c0_10] : memref<1x128xf32, #tpu.memory_space<vmem>>, vector<1x128xf32>
    %12 = vector.broadcast %11 : vector<1x128xf32> to vector<8x128xf32>
    %13 = arith.addf %10, %12 : vector<8x128xf32>
    %cst_11 = arith.constant 0.000000e+00 : f32
    %14 = vector.broadcast %cst_11 : f32 to vector<8x128xf32>
    %15 = arith.maximumf %13, %14 : vector<8x128xf32>
    %16 = arith.truncf %15 : vector<8x128xf32> to vector<8x128xbf16>
    %c0_12 = arith.constant 0 : index
    %c0_13 = arith.constant 0 : index
    %17 = vector.load %arg6[%c0_12, %c0_13] : memref<128x32xbf16, #tpu.memory_space<vmem>>, vector<128x32xbf16>
    %cst_14 = arith.constant dense<0.000000e+00> : vector<8x32xf32>
    %18 = tpu.matmul %16, %17, %cst_14 {dimension_numbers = #tpu.dot_dimension_numbers<[1], [0], [0], [1], [0, 0, 1, 1], [], []>} : vector<8x128xbf16>, vector<128x32xbf16>, vector<8x32xf32> -> vector<8x32xf32>
    %c0_15 = arith.constant 0 : index
    %c0_16 = arith.constant 0 : index
    %19 = vector.load %arg7[%c0_15, %c0_16] : memref<1x32xf32, #tpu.memory_space<vmem>>, vector<1x32xf32>
    %20 = vector.broadcast %19 : vector<1x32xf32> to vector<8x32xf32>
    %21 = arith.addf %18, %20 : vector<8x32xf32>
    %cst_17 = arith.constant 0.000000e+00 : f32
    %22 = vector.broadcast %cst_17 : f32 to vector<8x32xf32>
    %23 = arith.maximumf %21, %22 : vector<8x32xf32>
    %24 = arith.truncf %23 : vector<8x32xf32> to vector<8x32xbf16>
    %c0_18 = arith.constant 0 : index
    %c0_19 = arith.constant 0 : index
    %25 = vector.load %arg8[%c0_18, %c0_19] : memref<32x1024xbf16, #tpu.memory_space<vmem>>, vector<32x1024xbf16>
    %cst_20 = arith.constant dense<0.000000e+00> : vector<8x1024xf32>
    %26 = tpu.matmul %24, %25, %cst_20 {dimension_numbers = #tpu.dot_dimension_numbers<[1], [0], [0], [1], [0, 0, 1, 1], [], []>} : vector<8x32xbf16>, vector<32x1024xbf16>, vector<8x1024xf32> -> vector<8x1024xf32>
    %c0_21 = arith.constant 0 : index
    %c0_22 = arith.constant 0 : index
    %27 = vector.load %arg9[%c0_21, %c0_22] : memref<1x1024xf32, #tpu.memory_space<vmem>>, vector<1x1024xf32>
    %28 = vector.broadcast %27 : vector<1x1024xf32> to vector<8x1024xf32>
    %29 = arith.addf %26, %28 : vector<8x1024xf32>
    %cst_23 = arith.constant 0.000000e+00 : f32
    %30 = vector.broadcast %cst_23 : f32 to vector<8x1024xf32>
    %31 = arith.subf %30, %29 : vector<8x1024xf32>
    %32 = math.exp %31 : vector<8x1024xf32>
    %cst_24 = arith.constant 1.000000e+00 : f32
    %33 = vector.broadcast %cst_24 : f32 to vector<8x1024xf32>
    %34 = arith.addf %33, %32 : vector<8x1024xf32>
    %35 = tpu.reciprocal %34 {approx = true} : vector<8x1024xf32> -> vector<8x1024xf32>
    %c0_25 = arith.constant 0 : index
    %c0_26 = arith.constant 0 : index
    %36 = vector.load %arg10[%c0_25, %c0_26] : memref<8x1024xf32, #tpu.memory_space<vmem>>, vector<8x1024xf32>
    tpu.vector_store %arg10[%c0_25, %c0_26], %35 {strides = array<i32>} : memref<8x1024xf32, #tpu.memory_space<vmem>>, vector<8x1024xf32>,
    %c0_27 = arith.constant 0 : index
    %c0_28 = arith.constant 0 : index
    %37 = vector.load %arg11[%c0_27, %c0_28] : memref<8x128xf32, #tpu.memory_space<vmem>>, vector<8x128xf32>
    tpu.vector_store %arg11[%c0_27, %c0_28], %15 {strides = array<i32>} : memref<8x128xf32, #tpu.memory_space<vmem>>, vector<8x128xf32>,
    return
  }
  func.func @transform_0(%arg0: i32) -> (i32, i32) {
    %c0_i32 = arith.constant 0 : i32
    %c0_i32_0 = arith.constant 0 : i32
    return %arg0, %c0_i32 : i32, i32
  }
  func.func @transform_1(%arg0: i32) -> (i32, i32) {
    %c0_i32 = arith.constant 0 : i32
    %c0_i32_0 = arith.constant 0 : i32
    %c0_i32_1 = arith.constant 0 : i32
    return %c0_i32, %c0_i32_0 : i32, i32
  }
  func.func @transform_2(%arg0: i32) -> (i32, i32) {
    %c0_i32 = arith.constant 0 : i32
    %c0_i32_0 = arith.constant 0 : i32
    %c0_i32_1 = arith.constant 0 : i32
    return %c0_i32, %c0_i32_0 : i32, i32
  }
  func.func @transform_3(%arg0: i32) -> (i32, i32) {
    %c0_i32 = arith.constant 0 : i32
    %c0_i32_0 = arith.constant 0 : i32
    %c0_i32_1 = arith.constant 0 : i32
    return %c0_i32, %c0_i32_0 : i32, i32
  }
  func.func @transform_4(%arg0: i32) -> (i32, i32) {
    %c0_i32 = arith.constant 0 : i32
    %c0_i32_0 = arith.constant 0 : i32
    %c0_i32_1 = arith.constant 0 : i32
    return %c0_i32, %c0_i32_0 : i32, i32
  }
  func.func @transform_5(%arg0: i32) -> (i32, i32) {
    %c0_i32 = arith.constant 0 : i32
    %c0_i32_0 = arith.constant 0 : i32
    %c0_i32_1 = arith.constant 0 : i32
    return %c0_i32, %c0_i32_0 : i32, i32
  }
  func.func @transform_6(%arg0: i32) -> (i32, i32) {
    %c0_i32 = arith.constant 0 : i32
    %c0_i32_0 = arith.constant 0 : i32
    %c0_i32_1 = arith.constant 0 : i32
    return %c0_i32, %c0_i32_0 : i32, i32
  }
  func.func @transform_7(%arg0: i32) -> (i32, i32) {
    %c0_i32 = arith.constant 0 : i32
    %c0_i32_0 = arith.constant 0 : i32
    %c0_i32_1 = arith.constant 0 : i32
    return %c0_i32, %c0_i32_0 : i32, i32
  }
  func.func @transform_8(%arg0: i32) -> (i32, i32) {
    %c0_i32 = arith.constant 0 : i32
    %c0_i32_0 = arith.constant 0 : i32
    %c0_i32_1 = arith.constant 0 : i32
    return %c0_i32, %c0_i32_0 : i32, i32
  }
  func.func @transform_9(%arg0: i32) -> (i32, i32) {
    %c0_i32 = arith.constant 0 : i32
    %c0_i32_0 = arith.constant 0 : i32
    return %arg0, %c0_i32 : i32, i32
  }
  func.func @transform_10(%arg0: i32) -> (i32, i32) {
    %c0_i32 = arith.constant 0 : i32
    %c0_i32_0 = arith.constant 0 : i32
    return %arg0, %c0_i32 : i32, i32
  }
}

</mosaic_0001>

<llo_original>
// kernel: ae_forward.1
$region0: #{ae_forward.1}
  #allocation0 [shape = 'u32[]', space=smem, size = 0x4, offset = 0x4, fixed_abs, tag = 'smem constant byte address 0x4 - core index']
  #allocation1 [shape = 'u32[144,128]{1,0:T(1,128)}', space=vmem, size = 0x12000, scoped, tag = 'internal scratch']
  %s0 = inlined_call_operand.vmem [shape: bf16[8,1024], index: 0, kind: input, shape index: {}]
  %s1 = inlined_call_operand.vmem [shape: bf16[1024,32], index: 1, kind: input, shape index: {}]
  %s2 = inlined_call_operand.vmem [shape: f32[1,32], index: 2, kind: input, shape index: {}]
  %s3 = inlined_call_operand.vmem [shape: bf16[32,128], index: 3, kind: input, shape index: {}]
  %s4 = inlined_call_operand.vmem [shape: f32[1,128], index: 4, kind: input, shape index: {}]
  %s5 = inlined_call_operand.vmem [shape: bf16[128,32], index: 5, kind: input, shape index: {}]
  %s6 = inlined_call_operand.vmem [shape: f32[1,32], index: 6, kind: input, shape index: {}]
  %s7 = inlined_call_operand.vmem [shape: bf16[32,1024], index: 7, kind: input, shape index: {}]
  %s8 = inlined_call_operand.vmem [shape: f32[1,1024], index: 8, kind: input, shape index: {}]
  %s9 = inlined_call_operand.vmem [shape: f32[8,1024], index: 9, kind: output, shape index: {0}]
  %s10 = inlined_call_operand.vmem [shape: f32[8,128], index: 10, kind: output, shape index: {1}]
  %11 = xla_tuple %s9, %s10
  %s12 = sld [smem:[#allocation0]]
  $region54: #{ae_forward.1} parent=0
    _
  %s14 = ssub.s32 1, %s12
  %s15 = scalar_select 0, %s14, %s12
  // Predicated region
  $region2: #{ae_forward.1} parent=0 // pred_check
    _
  $region3: #{ae_forward.1} parent=0 // pred_check_branch
    %17 = sbr.rel (0) target = $region5
  $region4: #{ae_forward.1} parent=0 // pred_region
    _
  $region5: #{ae_forward.1} parent=0 // pred_fallthru
    _
  // Predicated region
  $region6: #{ae_forward.1} parent=0 // pred_check
    _
  $region7: #{ae_forward.1} parent=0 // pred_check_branch
    %19 = sbr.rel (0) target = $region9
  $region8: #{ae_forward.1} parent=0 // pred_region
    _
  $region9: #{ae_forward.1} parent=0 // pred_fallthru
    _
  // Predicated region
  $region10: #{ae_forward.1} parent=0 // pred_check
    _
  $region11: #{ae_forward.1} parent=0 // pred_check_branch
    %21 = sbr.rel (0) target = $region13
  $region12: #{ae_forward.1} parent=0 // pred_region
    _
  $region13: #{ae_forward.1} parent=0 // pred_fallthru
    _
  // Predicated region
  $region14: #{ae_forward.1} parent=0 // pred_check
    _
  $region15: #{ae_forward.1} parent=0 // pred_check_branch
    %23 = sbr.rel (0) target = $region17
  $region16: #{ae_forward.1} parent=0 // pred_region
    _
  $region17: #{ae_forward.1} parent=0 // pred_fallthru
    _
  // Predicated region
  $region18: #{ae_forward.1} parent=0 // pred_check
    _
  $region19: #{ae_forward.1} parent=0 // pred_check_branch
    %25 = sbr.rel (0) target = $region21
  $region20: #{ae_forward.1} parent=0 // pred_region
    _
  $region21: #{ae_forward.1} parent=0 // pred_fallthru
    _
  // Predicated region
  $region22: #{ae_forward.1} parent=0 // pred_check
    _
  $region23: #{ae_forward.1} parent=0 // pred_check_branch
    %27 = sbr.rel (0) target = $region25
  $region24: #{ae_forward.1} parent=0 // pred_region
    _
  $region25: #{ae_forward.1} parent=0 // pred_fallthru
    _
  // Predicated region
  $region26: #{ae_forward.1} parent=0 // pred_check
    _
  $region27: #{ae_forward.1} parent=0 // pred_check_branch
    %29 = sbr.rel (0) target = $region29
  $region28: #{ae_forward.1} parent=0 // pred_region
    _
  $region29: #{ae_forward.1} parent=0 // pred_fallthru
    _
  // Predicated region
  $region30: #{ae_forward.1} parent=0 // pred_check
    _
  $region31: #{ae_forward.1} parent=0 // pred_check_branch
    %31 = sbr.rel (0) target = $region33
  $region32: #{ae_forward.1} parent=0 // pred_region
    _
  $region33: #{ae_forward.1} parent=0 // pred_fallthru
    _
  // Predicated region
  $region34: #{ae_forward.1} parent=0 // pred_check
    _
  $region35: #{ae_forward.1} parent=0 // pred_check_branch
    %33 = sbr.rel (0) target = $region37
  $region36: #{ae_forward.1} parent=0 // pred_region
    _
  $region37: #{ae_forward.1} parent=0 // pred_fallthru
    _
  %v35 = vld [vmem:[%s0] sm:$0xff]
  %v36 = vld [vmem:[%s0 + $0x8] sm:$0xff]
  %v37 = vld [vmem:[%s0 + $0x10] sm:$0xff]
  %v38 = vld [vmem:[%s0 + $0x18] sm:$0xff]
  %v39 = vld [vmem:[%s1] sm:$0xf]
  %v40 = vld [vmem:[%s1 + $0x4] sm:$0xf]
  %v41 = vld [vmem:[%s1 + $0x8] sm:$0xf]
  %v42 = vld [vmem:[%s1 + $0xc] sm:$0xf]
  %v43 = vld [vmem:[%s1 + $0x10] sm:$0xf]
  %v44 = vld [vmem:[%s1 + $0x14] sm:$0xf]
  %v45 = vld [vmem:[%s1 + $0x18] sm:$0xf]
  %v46 = vld [vmem:[%s1 + $0x1c] sm:$0xf]
  %v47 = vld [vmem:[%s1 + $0x20] sm:$0xf]
  %v48 = vld [vmem:[%s1 + $0x24] sm:$0xf]
  %v49 = vld [vmem:[%s1 + $0x28] sm:$0xf]
  %v50 = vld [vmem:[%s1 + $0x2c] sm:$0xf]
  %v51 = vld [vmem:[%s1 + $0x30] sm:$0xf]
  %v52 = vld [vmem:[%s1 + $0x34] sm:$0xf]
  %v53 = vld [vmem:[%s1 + $0x38] sm:$0xf]
  %v54 = vld [vmem:[%s1 + $0x3c] sm:$0xf]
  %v55 = vld [vmem:[%s1 + $0x40] sm:$0xf]
  %v56 = vld [vmem:[%s1 + $0x44] sm:$0xf]
  %v57 = vld [vmem:[%s1 + $0x48] sm:$0xf]
  %v58 = vld [vmem:[%s1 + $0x4c] sm:$0xf]
  %v59 = vld [vmem:[%s1 + $0x50] sm:$0xf]
  %v60 = vld [vmem:[%s1 + $0x54] sm:$0xf]
  %v61 = vld [vmem:[%s1 + $0x58] sm:$0xf]
  %v62 = vld [vmem:[%s1 + $0x5c] sm:$0xf]
  %v63 = vld [vmem:[%s1 + $0x60] sm:$0xf]
  %v64 = vld [vmem:[%s1 + $0x64] sm:$0xf]
  %v65 = vld [vmem:[%s1 + $0x68] sm:$0xf]
  %v66 = vld [vmem:[%s1 + $0x6c] sm:$0xf]
  %v67 = vld [vmem:[%s1 + $0x70] sm:$0xf]
  %v68 = vld [vmem:[%s1 + $0x74] sm:$0xf]
  %v69 = vld [vmem:[%s1 + $0x78] sm:$0xf]
  %v70 = vld [vmem:[%s1 + $0x7c] sm:$0xf]
  %v71 = vld [vmem:[%s1 + $0x80] sm:$0xf]
  %v72 = vld [vmem:[%s1 + $0x84] sm:$0xf]
  %v73 = vld [vmem:[%s1 + $0x88] sm:$0xf]
  %v74 = vld [vmem:[%s1 + $0x8c] sm:$0xf]
  %v75 = vld [vmem:[%s1 + $0x90] sm:$0xf]
  %v76 = vld [vmem:[%s1 + $0x94] sm:$0xf]
  %v77 = vld [vmem:[%s1 + $0x98] sm:$0xf]
  %v78 = vld [vmem:[%s1 + $0x9c] sm:$0xf]
  %v79 = vld [vmem:[%s1 + $0xa0] sm:$0xf]
  %v80 = vld [vmem:[%s1 + $0xa4] sm:$0xf]
  %v81 = vld [vmem:[%s1 + $0xa8] sm:$0xf]
  %v82 = vld [vmem:[%s1 + $0xac] sm:$0xf]
  %v83 = vld [vmem:[%s1 + $0xb0] sm:$0xf]
  %v84 = vld [vmem:[%s1 + $0xb4] sm:$0xf]
  %v85 = vld [vmem:[%s1 + $0xb8] sm:$0xf]
  %v86 = vld [vmem:[%s1 + $0xbc] sm:$0xf]
  %v87 = vld [vmem:[%s1 + $0xc0] sm:$0xf]
  %v88 = vld [vmem:[%s1 + $0xc4] sm:$0xf]
  %v89 = vld [vmem:[%s1 + $0xc8] sm:$0xf]
  %v90 = vld [vmem:[%s1 + $0xcc] sm:$0xf]
  %v91 = vld [vmem:[%s1 + $0xd0] sm:$0xf]
  %v92 = vld [vmem:[%s1 + $0xd4] sm:$0xf]
  %v93 = vld [vmem:[%s1 + $0xd8] sm:$0xf]
  %v94 = vld [vmem:[%s1 + $0xdc] sm:$0xf]
  %v95 = vld [vmem:[%s1 + $0xe0] sm:$0xf]
  %v96 = vld [vmem:[%s1 + $0xe4] sm:$0xf]
  %v97 = vld [vmem:[%s1 + $0xe8] sm:$0xf]
  %v98 = vld [vmem:[%s1 + $0xec] sm:$0xf]
  %v99 = vld [vmem:[%s1 + $0xf0] sm:$0xf]
  %v100 = vld [vmem:[%s1 + $0xf4] sm:$0xf]
  %v101 = vld [vmem:[%s1 + $0xf8] sm:$0xf]
  %v102 = vld [vmem:[%s1 + $0xfc] sm:$0xf]
  %v103 = vld [vmem:[%s1 + $0x100] sm:$0xf]
  %v104 = vld [vmem:[%s1 + $0x104] sm:$0xf]
  %v105 = vld [vmem:[%s1 + $0x108] sm:$0xf]
  %v106 = vld [vmem:[%s1 + $0x10c] sm:$0xf]
  %v107 = vld [vmem:[%s1 + $0x110] sm:$0xf]
  %v108 = vld [vmem:[%s1 + $0x114] sm:$0xf]
  %v109 = vld [vmem:[%s1 + $0x118] sm:$0xf]
  %v110 = vld [vmem:[%s1 + $0x11c] sm:$0xf]
  %v111 = vld [vmem:[%s1 + $0x120] sm:$0xf]
  %v112 = vld [vmem:[%s1 + $0x124] sm:$0xf]
  %v113 = vld [vmem:[%s1 + $0x128] sm:$0xf]
  %v114 = vld [vmem:[%s1 + $0x12c] sm:$0xf]
  %v115 = vld [vmem:[%s1 + $0x130] sm:$0xf]
  %v116 = vld [vmem:[%s1 + $0x134] sm:$0xf]
  %v117 = vld [vmem:[%s1 + $0x138] sm:$0xf]
  %v118 = vld [vmem:[%s1 + $0x13c] sm:$0xf]
  %v119 = vld [vmem:[%s1 + $0x140] sm:$0xf]
  %v120 = vld [vmem:[%s1 + $0x144] sm:$0xf]
  %v121 = vld [vmem:[%s1 + $0x148] sm:$0xf]
  %v122 = vld [vmem:[%s1 + $0x14c] sm:$0xf]
  %v123 = vld [vmem:[%s1 + $0x150] sm:$0xf]
  %v124 = vld [vmem:[%s1 + $0x154] sm:$0xf]
  %v125 = vld [vmem:[%s1 + $0x158] sm:$0xf]
  %v126 = vld [vmem:[%s1 + $0x15c] sm:$0xf]
  %v127 = vld [vmem:[%s1 + $0x160] sm:$0xf]
  %v128 = vld [vmem:[%s1 + $0x164] sm:$0xf]
  %v129 = vld [vmem:[%s1 + $0x168] sm:$0xf]
  %v130 = vld [vmem:[%s1 + $0x16c] sm:$0xf]
  %v131 = vld [vmem:[%s1 + $0x170] sm:$0xf]
  %v132 = vld [vmem:[%s1 + $0x174] sm:$0xf]
  %v133 = vld [vmem:[%s1 + $0x178] sm:$0xf]
  %v134 = vld [vmem:[%s1 + $0x17c] sm:$0xf]
  %v135 = vld [vmem:[%s1 + $0x180] sm:$0xf]
  %v136 = vld [vmem:[%s1 + $0x184] sm:$0xf]
  %v137 = vld [vmem:[%s1 + $0x188] sm:$0xf]
  %v138 = vld [vmem:[%s1 + $0x18c] sm:$0xf]
  %v139 = vld [vmem:[%s1 + $0x190] sm:$0xf]
  %v140 = vld [vmem:[%s1 + $0x194] sm:$0xf]
  %v141 = vld [vmem:[%s1 + $0x198] sm:$0xf]
  %v142 = vld [vmem:[%s1 + $0x19c] sm:$0xf]
  %v143 = vld [vmem:[%s1 + $0x1a0] sm:$0xf]
  %v144 = vld [vmem:[%s1 + $0x1a4] sm:$0xf]
  %v145 = vld [vmem:[%s1 + $0x1a8] sm:$0xf]
  %v146 = vld [vmem:[%s1 + $0x1ac] sm:$0xf]
  %v147 = vld [vmem:[%s1 + $0x1b0] sm:$0xf]
  %v148 = vld [vmem:[%s1 + $0x1b4] sm:$0xf]
  %v149 = vld [vmem:[%s1 + $0x1b8] sm:$0xf]
  %v150 = vld [vmem:[%s1 + $0x1bc] sm:$0xf]
  %v151 = vld [vmem:[%s1 + $0x1c0] sm:$0xf]
  %v152 = vld [vmem:[%s1 + $0x1c4] sm:$0xf]
  %v153 = vld [vmem:[%s1 + $0x1c8] sm:$0xf]
  %v154 = vld [vmem:[%s1 + $0x1cc] sm:$0xf]
  %v155 = vld [vmem:[%s1 + $0x1d0] sm:$0xf]
  %v156 = vld [vmem:[%s1 + $0x1d4] sm:$0xf]
  %v157 = vld [vmem:[%s1 + $0x1d8] sm:$0xf]
  %v158 = vld [vmem:[%s1 + $0x1dc] sm:$0xf]
  %v159 = vld [vmem:[%s1 + $0x1e0] sm:$0xf]
  %v160 = vld [vmem:[%s1 + $0x1e4] sm:$0xf]
  %v161 = vld [vmem:[%s1 + $0x1e8] sm:$0xf]
  %v162 = vld [vmem:[%s1 + $0x1ec] sm:$0xf]
  %v163 = vld [vmem:[%s1 + $0x1f0] sm:$0xf]
  %v164 = vld [vmem:[%s1 + $0x1f4] sm:$0xf]
  %v165 = vld [vmem:[%s1 + $0x1f8] sm:$0xf]
  %v166 = vld [vmem:[%s1 + $0x1fc] sm:$0xf]
  %v167 = vld [vmem:[%s2] sm:$0x1]
  %v169 = vlaneseq
  %v170 = vshrl.u32 %v169, 7
  %v171 = vsub.s32 0, %v170
  %v172 = vrot.slane %v167, %v171
  %v178 = vunpack.c.l.b16 %v35
  %v179 = vunpack.c.h.b16 %v35
  %v180 = vunpack.c.l.b16 %v36
  %v181 = vunpack.c.h.b16 %v36
  %v182 = vunpack.c.l.b16 %v37
  %v183 = vunpack.c.h.b16 %v37
  %v184 = vunpack.c.l.b16 %v38
  %v185 = vunpack.c.h.b16 %v38
  %v186 = vpack.c.b16 %v178, %v178
  %v187 = vpack.c.b16 %v179, %v179
  %v188 = vpack.c.b16 %v180, %v180
  %v189 = vpack.c.b16 %v181, %v181
  %v190 = vpack.c.b16 %v182, %v182
  %v191 = vpack.c.b16 %v183, %v183
  %v192 = vpack.c.b16 %v184, %v184
  %v193 = vpack.c.b16 %v185, %v185
  %v330 = vunpack.c.l.b16 %v39
  %v331 = vunpack.c.l.b16 %v40
  %v332 = vunpack.c.l.b16 %v41
  %v333 = vunpack.c.l.b16 %v42
  %v334 = vunpack.c.l.b16 %v43
  %v335 = vunpack.c.l.b16 %v44
  %v336 = vunpack.c.l.b16 %v45
  %v337 = vunpack.c.l.b16 %v46
  %v338 = vunpack.c.l.b16 %v47
  %v339 = vunpack.c.l.b16 %v48
  %v340 = vunpack.c.l.b16 %v49
  %v341 = vunpack.c.l.b16 %v50
  %v342 = vunpack.c.l.b16 %v51
  %v343 = vunpack.c.l.b16 %v52
  %v344 = vunpack.c.l.b16 %v53
  %v345 = vunpack.c.l.b16 %v54
  %v346 = vunpack.c.l.b16 %v55
  %v347 = vunpack.c.l.b16 %v56
  %v348 = vunpack.c.l.b16 %v57
  %v349 = vunpack.c.l.b16 %v58
  %v350 = vunpack.c.l.b16 %v59
  %v351 = vunpack.c.l.b16 %v60
  %v352 = vunpack.c.l.b16 %v61
  %v353 = vunpack.c.l.b16 %v62
  %v354 = vunpack.c.l.b16 %v63
  %v355 = vunpack.c.l.b16 %v64
  %v356 = vunpack.c.l.b16 %v65
  %v357 = vunpack.c.l.b16 %v66
  %v358 = vunpack.c.l.b16 %v67
  %v359 = vunpack.c.l.b16 %v68
  %v360 = vunpack.c.l.b16 %v69
  %v361 = vunpack.c.l.b16 %v70
  %v362 = vunpack.c.l.b16 %v71
  %v363 = vunpack.c.l.b16 %v72
  %v364 = vunpack.c.l.b16 %v73
  %v365 = vunpack.c.l.b16 %v74
  %v366 = vunpack.c.l.b16 %v75
  %v367 = vunpack.c.l.b16 %v76
  %v368 = vunpack.c.l.b16 %v77
  %v369 = vunpack.c.l.b16 %v78
  %v370 = vunpack.c.l.b16 %v79
  %v371 = vunpack.c.l.b16 %v80
  %v372 = vunpack.c.l.b16 %v81
  %v373 = vunpack.c.l.b16 %v82
  %v374 = vunpack.c.l.b16 %v83
  %v375 = vunpack.c.l.b16 %v84
  %v376 = vunpack.c.l.b16 %v85
  %v377 = vunpack.c.l.b16 %v86
  %v378 = vunpack.c.l.b16 %v87
  %v379 = vunpack.c.l.b16 %v88
  %v380 = vunpack.c.l.b16 %v89
  %v381 = vunpack.c.l.b16 %v90
  %v382 = vunpack.c.l.b16 %v91
  %v383 = vunpack.c.l.b16 %v92
  %v384 = vunpack.c.l.b16 %v93
  %v385 = vunpack.c.l.b16 %v94
  %v386 = vunpack.c.l.b16 %v95
  %v387 = vunpack.c.l.b16 %v96
  %v388 = vunpack.c.l.b16 %v97
  %v389 = vunpack.c.l.b16 %v98
  %v390 = vunpack.c.l.b16 %v99
  %v391 = vunpack.c.l.b16 %v100
  %v392 = vunpack.c.l.b16 %v101
  %v393 = vunpack.c.l.b16 %v102
  %v394 = vunpack.c.l.b16 %v103
  %v395 = vunpack.c.l.b16 %v104
  %v396 = vunpack.c.l.b16 %v105
  %v397 = vunpack.c.l.b16 %v106
  %v398 = vunpack.c.l.b16 %v107
  %v399 = vunpack.c.l.b16 %v108
  %v400 = vunpack.c.l.b16 %v109
  %v401 = vunpack.c.l.b16 %v110
  %v402 = vunpack.c.l.b16 %v111
  %v403 = vunpack.c.l.b16 %v112
  %v404 = vunpack.c.l.b16 %v113
  %v405 = vunpack.c.l.b16 %v114
  %v406 = vunpack.c.l.b16 %v115
  %v407 = vunpack.c.l.b16 %v116
  %v408 = vunpack.c.l.b16 %v117
  %v409 = vunpack.c.l.b16 %v118
  %v410 = vunpack.c.l.b16 %v119
  %v411 = vunpack.c.l.b16 %v120
  %v412 = vunpack.c.l.b16 %v121
  %v413 = vunpack.c.l.b16 %v122
  %v414 = vunpack.c.l.b16 %v123
  %v415 = vunpack.c.l.b16 %v124
  %v416 = vunpack.c.l.b16 %v125
  %v417 = vunpack.c.l.b16 %v126
  %v418 = vunpack.c.l.b16 %v127
  %v419 = vunpack.c.l.b16 %v128
  %v420 = vunpack.c.l.b16 %v129
  %v421 = vunpack.c.l.b16 %v130
  %v422 = vunpack.c.l.b16 %v131
  %v423 = vunpack.c.l.b16 %v132
  %v424 = vunpack.c.l.b16 %v133
  %v425 = vunpack.c.l.b16 %v134
  %v426 = vunpack.c.l.b16 %v135
  %v427 = vunpack.c.l.b16 %v136
  %v428 = vunpack.c.l.b16 %v137
  %v429 = vunpack.c.l.b16 %v138
  %v430 = vunpack.c.l.b16 %v139
  %v431 = vunpack.c.l.b16 %v140
  %v432 = vunpack.c.l.b16 %v141
  %v433 = vunpack.c.l.b16 %v142
  %v434 = vunpack.c.l.b16 %v143
  %v435 = vunpack.c.l.b16 %v144
  %v436 = vunpack.c.l.b16 %v145
  %v437 = vunpack.c.l.b16 %v146
  %v438 = vunpack.c.l.b16 %v147
  %v439 = vunpack.c.l.b16 %v148
  %v440 = vunpack.c.l.b16 %v149
  %v441 = vunpack.c.l.b16 %v150
  %v442 = vunpack.c.l.b16 %v151
  %v443 = vunpack.c.l.b16 %v152
  %v444 = vunpack.c.l.b16 %v153
  %v445 = vunpack.c.l.b16 %v154
  %v446 = vunpack.c.l.b16 %v155
  %v447 = vunpack.c.l.b16 %v156
  %v448 = vunpack.c.l.b16 %v157
  %v449 = vunpack.c.l.b16 %v158
  %v450 = vunpack.c.l.b16 %v159
  %v451 = vunpack.c.l.b16 %v160
  %v452 = vunpack.c.l.b16 %v161
  %v453 = vunpack.c.l.b16 %v162
  %v454 = vunpack.c.l.b16 %v163
  %v455 = vunpack.c.l.b16 %v164
  %v456 = vunpack.c.l.b16 %v165
  %v457 = vunpack.c.l.b16 %v166
  %v458 = vpack.c.b16 %v331, %v330
  %v459 = vpack.c.b16 %v333, %v332
  %v460 = vpack.c.b16 %v335, %v334
  %v461 = vpack.c.b16 %v337, %v336
  %v462 = vpack.c.b16 %v339, %v338
  %v463 = vpack.c.b16 %v341, %v340
  %v464 = vpack.c.b16 %v343, %v342
  %v465 = vpack.c.b16 %v345, %v344
  %v466 = vpack.c.b16 %v347, %v346
  %v467 = vpack.c.b16 %v349, %v348
  %v468 = vpack.c.b16 %v351, %v350
  %v469 = vpack.c.b16 %v353, %v352
  %v470 = vpack.c.b16 %v355, %v354
  %v471 = vpack.c.b16 %v357, %v356
  %v472 = vpack.c.b16 %v359, %v358
  %v473 = vpack.c.b16 %v361, %v360
  %v474 = vpack.c.b16 %v363, %v362
  %v475 = vpack.c.b16 %v365, %v364
  %v476 = vpack.c.b16 %v367, %v366
  %v477 = vpack.c.b16 %v369, %v368
  %v478 = vpack.c.b16 %v371, %v370
  %v479 = vpack.c.b16 %v373, %v372
  %v480 = vpack.c.b16 %v375, %v374
  %v481 = vpack.c.b16 %v377, %v376
  %v482 = vpack.c.b16 %v379, %v378
  %v483 = vpack.c.b16 %v381, %v380
  %v484 = vpack.c.b16 %v383, %v382
  %v485 = vpack.c.b16 %v385, %v384
  %v486 = vpack.c.b16 %v387, %v386
  %v487 = vpack.c.b16 %v389, %v388
  %v488 = vpack.c.b16 %v391, %v390
  %v489 = vpack.c.b16 %v393, %v392
  %v490 = vpack.c.b16 %v395, %v394
  %v491 = vpack.c.b16 %v397, %v396
  %v492 = vpack.c.b16 %v399, %v398
  %v493 = vpack.c.b16 %v401, %v400
  %v494 = vpack.c.b16 %v403, %v402
  %v495 = vpack.c.b16 %v405, %v404
  %v496 = vpack.c.b16 %v407, %v406
  %v497 = vpack.c.b16 %v409, %v408
  %v498 = vpack.c.b16 %v411, %v410
  %v499 = vpack.c.b16 %v413, %v412
  %v500 = vpack.c.b16 %v415, %v414
  %v501 = vpack.c.b16 %v417, %v416
  %v502 = vpack.c.b16 %v419, %v418
  %v503 = vpack.c.b16 %v421, %v420
  %v504 = vpack.c.b16 %v423, %v422
  %v505 = vpack.c.b16 %v425, %v424
  %v506 = vpack.c.b16 %v427, %v426
  %v507 = vpack.c.b16 %v429, %v428
  %v508 = vpack.c.b16 %v431, %v430
  %v509 = vpack.c.b16 %v433, %v432
  %v510 = vpack.c.b16 %v435, %v434
  %v511 = vpack.c.b16 %v437, %v436
  %v512 = vpack.c.b16 %v439, %v438
  %v513 = vpack.c.b16 %v441, %v440
  %v514 = vpack.c.b16 %v443, %v442
  %v515 = vpack.c.b16 %v445, %v444
  %v516 = vpack.c.b16 %v447, %v446
  %v517 = vpack.c.b16 %v449, %v448
  %v518 = vpack.c.b16 %v451, %v450
  %v519 = vpack.c.b16 %v453, %v452
  %v520 = vpack.c.b16 %v455, %v454
  %v521 = vpack.c.b16 %v457, %v456
  %586 = vmatprep.subr.bf16.mxu0 0
  %587 = vmatpush1.bf16.msra.mxu0 %v458
  %588 = vmatprep.subr.bf16.mxu0 0
  %589 = vmatpush1.bf16.msra.mxu0 %v459
  %590 = vmatprep.subr.bf16.mxu0 0
  %591 = vmatpush1.bf16.msra.mxu0 %v460
  %592 = vmatprep.subr.bf16.mxu0 0
  %593 = vmatpush1.bf16.msra.mxu0 %v461
  %594 = vmatprep.subr.bf16.mxu0 0
  %595 = vmatpush1.bf16.msra.mxu0 %v462
  %596 = vmatprep.subr.bf16.mxu0 0
  %597 = vmatpush1.bf16.msra.mxu0 %v463
  %598 = vmatprep.subr.bf16.mxu0 0
  %599 = vmatpush1.bf16.msra.mxu0 %v464
  %600 = vmatprep.subr.bf16.mxu0 0
  %601 = vmatpush1.bf16.msra.mxu0 %v465
  %602 = vmatprep.subr.bf16.mxu0 0
  %603 = vmatpush1.bf16.msra.mxu0 %v466
  %604 = vmatprep.subr.bf16.mxu0 0
  %605 = vmatpush1.bf16.msra.mxu0 %v467
  %606 = vmatprep.subr.bf16.mxu0 0
  %607 = vmatpush1.bf16.msra.mxu0 %v468
  %608 = vmatprep.subr.bf16.mxu0 0
  %609 = vmatpush1.bf16.msra.mxu0 %v469
  %610 = vmatprep.subr.bf16.mxu0 0
  %611 = vmatpush1.bf16.msra.mxu0 %v470
  %612 = vmatprep.subr.bf16.mxu0 0
  %613 = vmatpush1.bf16.msra.mxu0 %v471
  %614 = vmatprep.subr.bf16.mxu0 0
  %615 = vmatpush1.bf16.msra.mxu0 %v472
  %616 = vmatprep.subr.bf16.mxu0 0
  %617 = vmatpush1.bf16.msra.mxu0 %v473
  %618 = vmatprep.mubr.bf16.mxu0 %v187
  %619 = vmatmul.mubr.bf16.gmra.mrb[0].mxu0 %v186
  %v620 = vpop.f32.mrb[0].mxu0
  %v621 = vadd.f32 %v172, %v620
  %v622 = vpop.f32.mrb[0].mxu0
  %v623 = vpop.f32.mrb[0].mxu0
  %v624 = vpop.f32.mrb[0].mxu0
  %625 = vdwg.mxu0
  %626 = vmatprep.subr.bf16.mxu0 0
  %627 = vmatpush1.bf16.msra.mxu0 %v474
  %628 = vmatprep.subr.bf16.mxu0 0
  %629 = vmatpush1.bf16.msra.mxu0 %v475
  %630 = vmatprep.subr.bf16.mxu0 0
  %631 = vmatpush1.bf16.msra.mxu0 %v476
  %632 = vmatprep.subr.bf16.mxu0 0
  %633 = vmatpush1.bf16.msra.mxu0 %v477
  %634 = vmatprep.subr.bf16.mxu0 0
  %635 = vmatpush1.bf16.msra.mxu0 %v478
  %636 = vmatprep.subr.bf16.mxu0 0
  %637 = vmatpush1.bf16.msra.mxu0 %v479
  %638 = vmatprep.subr.bf16.mxu0 0
  %639 = vmatpush1.bf16.msra.mxu0 %v480
  %640 = vmatprep.subr.bf16.mxu0 0
  %641 = vmatpush1.bf16.msra.mxu0 %v481
  %642 = vmatprep.subr.bf16.mxu0 0
  %643 = vmatpush1.bf16.msra.mxu0 %v482
  %644 = vmatprep.subr.bf16.mxu0 0
  %645 = vmatpush1.bf16.msra.mxu0 %v483
  %646 = vmatprep.subr.bf16.mxu0 0
  %647 = vmatpush1.bf16.msra.mxu0 %v484
  %648 = vmatprep.subr.bf16.mxu0 0
  %649 = vmatpush1.bf16.msra.mxu0 %v485
  %650 = vmatprep.subr.bf16.mxu0 0
  %651 = vmatpush1.bf16.msra.mxu0 %v486
  %652 = vmatprep.subr.bf16.mxu0 0
  %653 = vmatpush1.bf16.msra.mxu0 %v487
  %654 = vmatprep.subr.bf16.mxu0 0
  %655 = vmatpush1.bf16.msra.mxu0 %v488
  %656 = vmatprep.subr.bf16.mxu0 0
  %657 = vmatpush1.bf16.msra.mxu0 %v489
  %658 = vmatprep.mubr.bf16.mxu0 %v189
  %659 = vmatmul.mubr.bf16.gmra.mrb[0].mxu0 %v188
  %v660 = vpop.f32.mrb[0].mxu0
  %v661 = vadd.f32 %v621, %v660
  %v662 = vpop.f32.mrb[0].mxu0
  %v663 = vpop.f32.mrb[0].mxu0
  %v664 = vpop.f32.mrb[0].mxu0
  %665 = vdwg.mxu0
  %666 = vmatprep.subr.bf16.mxu0 0
  %667 = vmatpush1.bf16.msra.mxu0 %v490
  %668 = vmatprep.subr.bf16.mxu0 0
  %669 = vmatpush1.bf16.msra.mxu0 %v491
  %670 = vmatprep.subr.bf16.mxu0 0
  %671 = vmatpush1.bf16.msra.mxu0 %v492
  %672 = vmatprep.subr.bf16.mxu0 0
  %673 = vmatpush1.bf16.msra.mxu0 %v493
  %674 = vmatprep.subr.bf16.mxu0 0
  %675 = vmatpush1.bf16.msra.mxu0 %v494
  %676 = vmatprep.subr.bf16.mxu0 0
  %677 = vmatpush1.bf16.msra.mxu0 %v495
  %678 = vmatprep.subr.bf16.mxu0 0
  %679 = vmatpush1.bf16.msra.mxu0 %v496
  %680 = vmatprep.subr.bf16.mxu0 0
  %681 = vmatpush1.bf16.msra.mxu0 %v497
  %682 = vmatprep.subr.bf16.mxu0 0
  %683 = vmatpush1.bf16.msra.mxu0 %v498
  %684 = vmatprep.subr.bf16.mxu0 0
  %685 = vmatpush1.bf16.msra.mxu0 %v499
  %686 = vmatprep.subr.bf16.mxu0 0
  %687 = vmatpush1.bf16.msra.mxu0 %v500
  %688 = vmatprep.subr.bf16.mxu0 0
  %689 = vmatpush1.bf16.msra.mxu0 %v501
  %690 = vmatprep.subr.bf16.mxu0 0
  %691 = vmatpush1.bf16.msra.mxu0 %v502
  %692 = vmatprep.subr.bf16.mxu0 0
  %693 = vmatpush1.bf16.msra.mxu0 %v503
  %694 = vmatprep.subr.bf16.mxu0 0
  %695 = vmatpush1.bf16.msra.mxu0 %v504
  %696 = vmatprep.subr.bf16.mxu0 0
  %697 = vmatpush1.bf16.msra.mxu0 %v505
  %698 = vmatprep.mubr.bf16.mxu0 %v191
  %699 = vmatmul.mubr.bf16.gmra.mrb[0].mxu0 %v190
  %v700 = vpop.f32.mrb[0].mxu0
  %v701 = vadd.f32 %v661, %v700
  %v702 = vpop.f32.mrb[0].mxu0
  %v703 = vpop.f32.mrb[0].mxu0
  %v704 = vpop.f32.mrb[0].mxu0
  %705 = vdwg.mxu0
  %706 = vmatprep.subr.bf16.mxu0 0
  %707 = vmatpush1.bf16.msra.mxu0 %v506
  %708 = vmatprep.subr.bf16.mxu0 0
  %709 = vmatpush1.bf16.msra.mxu0 %v507
  %710 = vmatprep.subr.bf16.mxu0 0
  %711 = vmatpush1.bf16.msra.mxu0 %v508
  %712 = vmatprep.subr.bf16.mxu0 0
  %713 = vmatpush1.bf16.msra.mxu0 %v509
  %714 = vmatprep.subr.bf16.mxu0 0
  %715 = vmatpush1.bf16.msra.mxu0 %v510
  %716 = vmatprep.subr.bf16.mxu0 0
  %717 = vmatpush1.bf16.msra.mxu0 %v511
  %718 = vmatprep.subr.bf16.mxu0 0
  %719 = vmatpush1.bf16.msra.mxu0 %v512
  %720 = vmatprep.subr.bf16.mxu0 0
  %721 = vmatpush1.bf16.msra.mxu0 %v513
  %722 = vmatprep.subr.bf16.mxu0 0
  %723 = vmatpush1.bf16.msra.mxu0 %v514
  %724 = vmatprep.subr.bf16.mxu0 0
  %725 = vmatpush1.bf16.msra.mxu0 %v515
  %726 = vmatprep.subr.bf16.mxu0 0
  %727 = vmatpush1.bf16.msra.mxu0 %v516
  %728 = vmatprep.subr.bf16.mxu0 0
  %729 = vmatpush1.bf16.msra.mxu0 %v517
  %730 = vmatprep.subr.bf16.mxu0 0
  %731 = vmatpush1.bf16.msra.mxu0 %v518
  %732 = vmatprep.subr.bf16.mxu0 0
  %733 = vmatpush1.bf16.msra.mxu0 %v519
  %734 = vmatprep.subr.bf16.mxu0 0
  %735 = vmatpush1.bf16.msra.mxu0 %v520
  %736 = vmatprep.subr.bf16.mxu0 0
  %737 = vmatpush1.bf16.msra.mxu0 %v521
  %738 = vmatprep.mubr.bf16.mxu0 %v193
  %739 = vmatmul.mubr.bf16.gmra.mrb[0].mxu0 %v192
  %v740 = vpop.f32.mrb[0].mxu0
  %v741 = vadd.f32 %v701, %v740
  %v742 = vpop.f32.mrb[0].mxu0
  %v743 = vpop.f32.mrb[0].mxu0
  %v744 = vpop.f32.mrb[0].mxu0
  %745 = vdwg.mxu0
  %v746 = vmax.f32 %v741, 0.0
  %v747 = vpack.c.bf16 %v746, %v746
  %v748 = vld [vmem:[%s3] sm:$0xf]
  %v749 = vld [vmem:[%s3 + $0x4] sm:$0xf]
  %v750 = vld [vmem:[%s3 + $0x8] sm:$0xf]
  %v751 = vld [vmem:[%s3 + $0xc] sm:$0xf]
  %v752 = vld [vmem:[%s4] sm:$0x1]
  %v754 = vlaneseq
  %v755 = vshrl.u32 %v754, 7
  %v756 = vsub.s32 0, %v755
  %v757 = vrot.slane %v752, %v756
  %v763 = vunpack.c.l.b16 %v748
  %v764 = vunpack.c.l.b16 %v749
  %v765 = vunpack.c.l.b16 %v750
  %v766 = vunpack.c.l.b16 %v751
  %v767 = vpack.c.b16 %v764, %v763
  %v768 = vpack.c.b16 %v766, %v765
  %vm771 = vcmask 261120
  %v773 = vsel %vm771, %v747, 0
  %775 = vmatprep.subr.bf16.mxu0 0
  %776 = vmatpush1.bf16.msra.mxu0 %v767
  %777 = vmatprep.subr.bf16.mxu0 0
  %778 = vmatpush1.bf16.msra.mxu0 %v768
  %779 = vmatprep.subr.bf16.mxu0 0
  %780 = vmatpush1.bf16.msra.mxu0 0
  %781 = vmatprep.subr.bf16.mxu0 0
  %782 = vmatpush1.bf16.msra.mxu0 0
  %783 = vmatprep.subr.bf16.mxu0 0
  %784 = vmatpush1.bf16.msra.mxu0 0
  %785 = vmatprep.subr.bf16.mxu0 0
  %786 = vmatpush1.bf16.msra.mxu0 0
  %787 = vmatprep.subr.bf16.mxu0 0
  %788 = vmatpush1.bf16.msra.mxu0 0
  %789 = vmatprep.subr.bf16.mxu0 0
  %790 = vmatpush1.bf16.msra.mxu0 0
  %791 = vmatprep.subr.bf16.mxu0 0
  %792 = vmatpush1.bf16.msra.mxu0 0
  %793 = vmatprep.subr.bf16.mxu0 0
  %794 = vmatpush1.bf16.msra.mxu0 0
  %795 = vmatprep.subr.bf16.mxu0 0
  %796 = vmatpush1.bf16.msra.mxu0 0
  %797 = vmatprep.subr.bf16.mxu0 0
  %798 = vmatpush1.bf16.msra.mxu0 0
  %799 = vmatprep.subr.bf16.mxu0 0
  %800 = vmatpush1.bf16.msra.mxu0 0
  %801 = vmatprep.subr.bf16.mxu0 0
  %802 = vmatpush1.bf16.msra.mxu0 0
  %803 = vmatprep.subr.bf16.mxu0 0
  %804 = vmatpush1.bf16.msra.mxu0 0
  %805 = vmatprep.subr.bf16.mxu0 0
  %806 = vmatpush1.bf16.msra.mxu0 0
  %807 = vmatprep.mubr.bf16.mxu0 0
  %808 = vmatmul.mubr.bf16.gmra.mrb[0].mxu0 %v773
  %v809 = vpop.f32.mrb[0].mxu0
  %v810 = vadd.f32 %v757, %v809
  %v811 = vpop.f32.mrb[0].mxu0
  %v812 = vpop.f32.mrb[0].mxu0
  %v813 = vpop.f32.mrb[0].mxu0
  %814 = vdwg.mxu0
  %v815 = vmax.f32 %v810, 0.0
  %v816 = vpack.c.bf16 %v815, %v815
  %v817 = vld [vmem:[%s5] sm:$0xf]
  %v818 = vld [vmem:[%s5 + $0x4] sm:$0xf]
  %v819 = vld [vmem:[%s5 + $0x8] sm:$0xf]
  %v820 = vld [vmem:[%s5 + $0xc] sm:$0xf]
  %v821 = vld [vmem:[%s5 + $0x10] sm:$0xf]
  %v822 = vld [vmem:[%s5 + $0x14] sm:$0xf]
  %v823 = vld [vmem:[%s5 + $0x18] sm:$0xf]
  %v824 = vld [vmem:[%s5 + $0x1c] sm:$0xf]
  %v825 = vld [vmem:[%s5 + $0x20] sm:$0xf]
  %v826 = vld [vmem:[%s5 + $0x24] sm:$0xf]
  %v827 = vld [vmem:[%s5 + $0x28] sm:$0xf]
  %v828 = vld [vmem:[%s5 + $0x2c] sm:$0xf]
  %v829 = vld [vmem:[%s5 + $0x30] sm:$0xf]
  %v830 = vld [vmem:[%s5 + $0x34] sm:$0xf]
  %v831 = vld [vmem:[%s5 + $0x38] sm:$0xf]
  %v832 = vld [vmem:[%s5 + $0x3c] sm:$0xf]
  %v833 = vld [vmem:[%s6] sm:$0x1]
  %v835 = vlaneseq
  %v836 = vshrl.u32 %v835, 7
  %v837 = vsub.s32 0, %v836
  %v838 = vrot.slane %v833, %v837
  %v856 = vunpack.c.l.b16 %v817
  %v857 = vunpack.c.l.b16 %v818
  %v858 = vunpack.c.l.b16 %v819
  %v859 = vunpack.c.l.b16 %v820
  %v860 = vunpack.c.l.b16 %v821
  %v861 = vunpack.c.l.b16 %v822
  %v862 = vunpack.c.l.b16 %v823
  %v863 = vunpack.c.l.b16 %v824
  %v864 = vunpack.c.l.b16 %v825
  %v865 = vunpack.c.l.b16 %v826
  %v866 = vunpack.c.l.b16 %v827
  %v867 = vunpack.c.l.b16 %v828
  %v868 = vunpack.c.l.b16 %v829
  %v869 = vunpack.c.l.b16 %v830
  %v870 = vunpack.c.l.b16 %v831
  %v871 = vunpack.c.l.b16 %v832
  %v872 = vpack.c.b16 %v857, %v856
  %v873 = vpack.c.b16 %v859, %v858
  %v874 = vpack.c.b16 %v861, %v860
  %v875 = vpack.c.b16 %v863, %v862
  %v876 = vpack.c.b16 %v865, %v864
  %v877 = vpack.c.b16 %v867, %v866
  %v878 = vpack.c.b16 %v869, %v868
  %v879 = vpack.c.b16 %v871, %v870
  %888 = vmatprep.subr.bf16.mxu0 0
  %889 = vmatpush1.bf16.msra.mxu0 %v872
  %890 = vmatprep.subr.bf16.mxu0 0
  %891 = vmatpush1.bf16.msra.mxu0 %v873
  %892 = vmatprep.subr.bf16.mxu0 0
  %893 = vmatpush1.bf16.msra.mxu0 %v874
  %894 = vmatprep.subr.bf16.mxu0 0
  %895 = vmatpush1.bf16.msra.mxu0 %v875
  %896 = vmatprep.subr.bf16.mxu0 0
  %897 = vmatpush1.bf16.msra.mxu0 %v876
  %898 = vmatprep.subr.bf16.mxu0 0
  %899 = vmatpush1.bf16.msra.mxu0 %v877
  %900 = vmatprep.subr.bf16.mxu0 0
  %901 = vmatpush1.bf16.msra.mxu0 %v878
  %902 = vmatprep.subr.bf16.mxu0 0
  %903 = vmatpush1.bf16.msra.mxu0 %v879
  %904 = vmatprep.subr.bf16.mxu0 0
  %905 = vmatpush1.bf16.msra.mxu0 0
  %906 = vmatprep.subr.bf16.mxu0 0
  %907 = vmatpush1.bf16.msra.mxu0 0
  %908 = vmatprep.subr.bf16.mxu0 0
  %909 = vmatpush1.bf16.msra.mxu0 0
  %910 = vmatprep.subr.bf16.mxu0 0
  %911 = vmatpush1.bf16.msra.mxu0 0
  %912 = vmatprep.subr.bf16.mxu0 0
  %913 = vmatpush1.bf16.msra.mxu0 0
  %914 = vmatprep.subr.bf16.mxu0 0
  %915 = vmatpush1.bf16.msra.mxu0 0
  %916 = vmatprep.subr.bf16.mxu0 0
  %917 = vmatpush1.bf16.msra.mxu0 0
  %918 = vmatprep.subr.bf16.mxu0 0
  %919 = vmatpush1.bf16.msra.mxu0 0
  %920 = vmatprep.mubr.bf16.mxu0 0
  %921 = vmatmul.mubr.bf16.gmra.mrb[0].mxu0 %v816
  %v922 = vpop.f32.mrb[0].mxu0
  %v923 = vadd.f32 %v838, %v922
  %v924 = vpop.f32.mrb[0].mxu0
  %v925 = vpop.f32.mrb[0].mxu0
  %v926 = vpop.f32.mrb[0].mxu0
  %927 = vdwg.mxu0
  %v928 = vmax.f32 %v923, 0.0
  %v929 = vpack.c.bf16 %v928, %v928
  %v930 = vld [vmem:[%s7] sm:$0xff]
  %v931 = vld [vmem:[%s7 + $0x8] sm:$0xff]
  %v932 = vld [vmem:[%s7 + $0x10] sm:$0xff]
  %v933 = vld [vmem:[%s7 + $0x18] sm:$0xff]
  %v934 = vld [vmem:[%s7 + $0x20] sm:$0xff]
  %v935 = vld [vmem:[%s7 + $0x28] sm:$0xff]
  %v936 = vld [vmem:[%s7 + $0x30] sm:$0xff]
  %v937 = vld [vmem:[%s7 + $0x38] sm:$0xff]
  %v938 = vld [vmem:[%s7 + $0x40] sm:$0xff]
  %v939 = vld [vmem:[%s7 + $0x48] sm:$0xff]
  %v940 = vld [vmem:[%s7 + $0x50] sm:$0xff]
  %v941 = vld [vmem:[%s7 + $0x58] sm:$0xff]
  %v942 = vld [vmem:[%s7 + $0x60] sm:$0xff]
  %v943 = vld [vmem:[%s7 + $0x68] sm:$0xff]
  %v944 = vld [vmem:[%s7 + $0x70] sm:$0xff]
  %v945 = vld [vmem:[%s7 + $0x78] sm:$0xff]
  %v946 = vld [vmem:[%s8] sm:$0xff]
  %v948 = vlaneseq
  %v949 = vshrl.u32 %v948, 7
  %v950 = vsub.s32 0, %v949
  %v951 = vrot.slane %v946, %v950
  %v952 = vlaneseq
  %v953 = vshrl.u32 %v952, 7
  %v954 = vsub.s32 1, %v953
  %v955 = vrot.slane %v946, %v954
  %v956 = vlaneseq
  %v957 = vshrl.u32 %v956, 7
  %v958 = vsub.s32 2, %v957
  %v959 = vrot.slane %v946, %v958
  %v960 = vlaneseq
  %v961 = vshrl.u32 %v960, 7
  %v962 = vsub.s32 3, %v961
  %v963 = vrot.slane %v946, %v962
  %v964 = vlaneseq
  %v965 = vshrl.u32 %v964, 7
  %v966 = vsub.s32 4, %v965
  %v967 = vrot.slane %v946, %v966
  %v968 = vlaneseq
  %v969 = vshrl.u32 %v968, 7
  %v970 = vsub.s32 5, %v969
  %v971 = vrot.slane %v946, %v970
  %v972 = vlaneseq
  %v973 = vshrl.u32 %v972, 7
  %v974 = vsub.s32 6, %v973
  %v975 = vrot.slane %v946, %v974
  %v976 = vlaneseq
  %v977 = vshrl.u32 %v976, 7
  %v978 = vsub.s32 7, %v977
  %v979 = vrot.slane %v946, %v978
  %v1004 = vunpack.c.l.b16 %v930
  %v1005 = vunpack.c.h.b16 %v930
  %v1006 = vunpack.c.l.b16 %v931
  %v1007 = vunpack.c.h.b16 %v931
  %v1008 = vunpack.c.l.b16 %v932
  %v1009 = vunpack.c.h.b16 %v932
  %v1010 = vunpack.c.l.b16 %v933
  %v1011 = vunpack.c.h.b16 %v933
  %v1012 = vunpack.c.l.b16 %v934
  %v1013 = vunpack.c.h.b16 %v934
  %v1014 = vunpack.c.l.b16 %v935
  %v1015 = vunpack.c.h.b16 %v935
  %v1016 = vunpack.c.l.b16 %v936
  %v1017 = vunpack.c.h.b16 %v936
  %v1018 = vunpack.c.l.b16 %v937
  %v1019 = vunpack.c.h.b16 %v937
  %v1020 = vunpack.c.l.b16 %v938
  %v1021 = vunpack.c.h.b16 %v938
  %v1022 = vunpack.c.l.b16 %v939
  %v1023 = vunpack.c.h.b16 %v939
  %v1024 = vunpack.c.l.b16 %v940
  %v1025 = vunpack.c.h.b16 %v940
  %v1026 = vunpack.c.l.b16 %v941
  %v1027 = vunpack.c.h.b16 %v941
  %v1028 = vunpack.c.l.b16 %v942
  %v1029 = vunpack.c.h.b16 %v942
  %v1030 = vunpack.c.l.b16 %v943
  %v1031 = vunpack.c.h.b16 %v943
  %v1032 = vunpack.c.l.b16 %v944
  %v1033 = vunpack.c.h.b16 %v944
  %v1034 = vunpack.c.l.b16 %v945
  %v1035 = vunpack.c.h.b16 %v945
  %v1036 = vpack.c.b16 %v1012, %v1004
  %v1037 = vpack.c.b16 %v1013, %v1005
  %v1038 = vpack.c.b16 %v1014, %v1006
  %v1039 = vpack.c.b16 %v1015, %v1007
  %v1040 = vpack.c.b16 %v1016, %v1008
  %v1041 = vpack.c.b16 %v1017, %v1009
  %v1042 = vpack.c.b16 %v1018, %v1010
  %v1043 = vpack.c.b16 %v1019, %v1011
  %v1044 = vpack.c.b16 %v1028, %v1020
  %v1045 = vpack.c.b16 %v1029, %v1021
  %v1046 = vpack.c.b16 %v1030, %v1022
  %v1047 = vpack.c.b16 %v1031, %v1023
  %v1048 = vpack.c.b16 %v1032, %v1024
  %v1049 = vpack.c.b16 %v1033, %v1025
  %v1050 = vpack.c.b16 %v1034, %v1026
  %v1051 = vpack.c.b16 %v1035, %v1027
  %v1069 = vsel %vm771, %v929, 0
  %1071 = vmatprep.subr.bf16.mxu0 %v1037
  %1072 = vmatpush1.bf16.msra.mxu0 %v1036
  %1073 = vmatprep.subr.bf16.mxu0 %v1045
  %1074 = vmatpush1.bf16.msra.mxu0 %v1044
  %1075 = vmatprep.subr.bf16.mxu0 0
  %1076 = vmatpush1.bf16.msra.mxu0 0
  %1077 = vmatprep.subr.bf16.mxu0 0
  %1078 = vmatpush1.bf16.msra.mxu0 0
  %1079 = vmatprep.subr.bf16.mxu0 0
  %1080 = vmatpush1.bf16.msra.mxu0 0
  %1081 = vmatprep.subr.bf16.mxu0 0
  %1082 = vmatpush1.bf16.msra.mxu0 0
  %1083 = vmatprep.subr.bf16.mxu0 0
  %1084 = vmatpush1.bf16.msra.mxu0 0
  %1085 = vmatprep.subr.bf16.mxu0 0
  %1086 = vmatpush1.bf16.msra.mxu0 0
  %1087 = vmatprep.subr.bf16.mxu0 0
  %1088 = vmatpush1.bf16.msra.mxu0 0
  %1089 = vmatprep.subr.bf16.mxu0 0
  %1090 = vmatpush1.bf16.msra.mxu0 0
  %1091 = vmatprep.subr.bf16.mxu0 0
  %1092 = vmatpush1.bf16.msra.mxu0 0
  %1093 = vmatprep.subr.bf16.mxu0 0
  %1094 = vmatpush1.bf16.msra.mxu0 0
  %1095 = vmatprep.subr.bf16.mxu0 0
  %1096 = vmatpush1.bf16.msra.mxu0 0
  %1097 = vmatprep.subr.bf16.mxu0 0
  %1098 = vmatpush1.bf16.msra.mxu0 0
  %1099 = vmatprep.subr.bf16.mxu0 0
  %1100 = vmatpush1.bf16.msra.mxu0 0
  %1101 = vmatprep.subr.bf16.mxu0 0
  %1102 = vmatpush1.bf16.msra.mxu0 0
  %1103 = vmatprep.mubr.bf16.mxu0 0
  %1104 = vmatmul.mubr.bf16.gmra.mrb[0].mxu0 %v1069
  %v1105 = vpop.f32.mrb[0].mxu0
  %v1106 = vadd.f32 %v951, %v1105
  %v1107 = vpop.f32.mrb[0].mxu0
  %v1108 = vadd.f32 %v955, %v1107
  %v1109 = vpop.f32.mrb[0].mxu0
  %v1110 = vpop.f32.mrb[0].mxu0
  %1111 = vdwg.mxu0
  %1112 = vmatprep.subr.bf16.mxu0 %v1039
  %1113 = vmatpush1.bf16.msra.mxu0 %v1038
  %1114 = vmatprep.subr.bf16.mxu0 %v1047
  %1115 = vmatpush1.bf16.msra.mxu0 %v1046
  %1116 = vmatprep.subr.bf16.mxu0 0
  %1117 = vmatpush1.bf16.msra.mxu0 0
  %1118 = vmatprep.subr.bf16.mxu0 0
  %1119 = vmatpush1.bf16.msra.mxu0 0
  %1120 = vmatprep.subr.bf16.mxu0 0
  %1121 = vmatpush1.bf16.msra.mxu0 0
  %1122 = vmatprep.subr.bf16.mxu0 0
  %1123 = vmatpush1.bf16.msra.mxu0 0
  %1124 = vmatprep.subr.bf16.mxu0 0
  %1125 = vmatpush1.bf16.msra.mxu0 0
  %1126 = vmatprep.subr.bf16.mxu0 0
  %1127 = vmatpush1.bf16.msra.mxu0 0
  %1128 = vmatprep.subr.bf16.mxu0 0
  %1129 = vmatpush1.bf16.msra.mxu0 0
  %1130 = vmatprep.subr.bf16.mxu0 0
  %1131 = vmatpush1.bf16.msra.mxu0 0
  %1132 = vmatprep.subr.bf16.mxu0 0
  %1133 = vmatpush1.bf16.msra.mxu0 0
  %1134 = vmatprep.subr.bf16.mxu0 0
  %1135 = vmatpush1.bf16.msra.mxu0 0
  %1136 = vmatprep.subr.bf16.mxu0 0
  %1137 = vmatpush1.bf16.msra.mxu0 0
  %1138 = vmatprep.subr.bf16.mxu0 0
  %1139 = vmatpush1.bf16.msra.mxu0 0
  %1140 = vmatprep.subr.bf16.mxu0 0
  %1141 = vmatpush1.bf16.msra.mxu0 0
  %1142 = vmatprep.subr.bf16.mxu0 0
  %1143 = vmatpush1.bf16.msra.mxu0 0
  %1144 = vmatprep.mubr.bf16.mxu0 0
  %1145 = vmatmul.mubr.bf16.gmra.mrb[0].mxu0 %v1069
  %v1146 = vpop.f32.mrb[0].mxu0
  %v1147 = vadd.f32 %v959, %v1146
  %v1148 = vpop.f32.mrb[0].mxu0
  %v1149 = vadd.f32 %v963, %v1148
  %v1150 = vpop.f32.mrb[0].mxu0
  %v1151 = vpop.f32.mrb[0].mxu0
  %1152 = vdwg.mxu0
  %1153 = vmatprep.subr.bf16.mxu0 %v1041
  %1154 = vmatpush1.bf16.msra.mxu0 %v1040
  %1155 = vmatprep.subr.bf16.mxu0 %v1049
  %1156 = vmatpush1.bf16.msra.mxu0 %v1048
  %1157 = vmatprep.subr.bf16.mxu0 0
  %1158 = vmatpush1.bf16.msra.mxu0 0
  %1159 = vmatprep.subr.bf16.mxu0 0
  %1160 = vmatpush1.bf16.msra.mxu0 0
  %1161 = vmatprep.subr.bf16.mxu0 0
  %1162 = vmatpush1.bf16.msra.mxu0 0
  %1163 = vmatprep.subr.bf16.mxu0 0
  %1164 = vmatpush1.bf16.msra.mxu0 0
  %1165 = vmatprep.subr.bf16.mxu0 0
  %1166 = vmatpush1.bf16.msra.mxu0 0
  %1167 = vmatprep.subr.bf16.mxu0 0
  %1168 = vmatpush1.bf16.msra.mxu0 0
  %1169 = vmatprep.subr.bf16.mxu0 0
  %1170 = vmatpush1.bf16.msra.mxu0 0
  %1171 = vmatprep.subr.bf16.mxu0 0
  %1172 = vmatpush1.bf16.msra.mxu0 0
  %1173 = vmatprep.subr.bf16.mxu0 0
  %1174 = vmatpush1.bf16.msra.mxu0 0
  %1175 = vmatprep.subr.bf16.mxu0 0
  %1176 = vmatpush1.bf16.msra.mxu0 0
  %1177 = vmatprep.subr.bf16.mxu0 0
  %1178 = vmatpush1.bf16.msra.mxu0 0
  %1179 = vmatprep.subr.bf16.mxu0 0
  %1180 = vmatpush1.bf16.msra.mxu0 0
  %1181 = vmatprep.subr.bf16.mxu0 0
  %1182 = vmatpush1.bf16.msra.mxu0 0
  %1183 = vmatprep.subr.bf16.mxu0 0
  %1184 = vmatpush1.bf16.msra.mxu0 0
  %1185 = vmatprep.mubr.bf16.mxu0 0
  %1186 = vmatmul.mubr.bf16.gmra.mrb[0].mxu0 %v1069
  %v1187 = vpop.f32.mrb[0].mxu0
  %v1188 = vadd.f32 %v967, %v1187
  %v1189 = vpop.f32.mrb[0].mxu0
  %v1190 = vadd.f32 %v971, %v1189
  %v1191 = vpop.f32.mrb[0].mxu0
  %v1192 = vpop.f32.mrb[0].mxu0
  %1193 = vdwg.mxu0
  %1194 = vmatprep.subr.bf16.mxu0 %v1043
  %1195 = vmatpush1.bf16.msra.mxu0 %v1042
  %1196 = vmatprep.subr.bf16.mxu0 %v1051
  %1197 = vmatpush1.bf16.msra.mxu0 %v1050
  %1198 = vmatprep.subr.bf16.mxu0 0
  %1199 = vmatpush1.bf16.msra.mxu0 0
  %1200 = vmatprep.subr.bf16.mxu0 0
  %1201 = vmatpush1.bf16.msra.mxu0 0
  %1202 = vmatprep.subr.bf16.mxu0 0
  %1203 = vmatpush1.bf16.msra.mxu0 0
  %1204 = vmatprep.subr.bf16.mxu0 0
  %1205 = vmatpush1.bf16.msra.mxu0 0
  %1206 = vmatprep.subr.bf16.mxu0 0
  %1207 = vmatpush1.bf16.msra.mxu0 0
  %1208 = vmatprep.subr.bf16.mxu0 0
  %1209 = vmatpush1.bf16.msra.mxu0 0
  %1210 = vmatprep.subr.bf16.mxu0 0
  %1211 = vmatpush1.bf16.msra.mxu0 0
  %1212 = vmatprep.subr.bf16.mxu0 0
  %1213 = vmatpush1.bf16.msra.mxu0 0
  %1214 = vmatprep.subr.bf16.mxu0 0
  %1215 = vmatpush1.bf16.msra.mxu0 0
  %1216 = vmatprep.subr.bf16.mxu0 0
  %1217 = vmatpush1.bf16.msra.mxu0 0
  %1218 = vmatprep.subr.bf16.mxu0 0
  %1219 = vmatpush1.bf16.msra.mxu0 0
  %1220 = vmatprep.subr.bf16.mxu0 0
  %1221 = vmatpush1.bf16.msra.mxu0 0
  %1222 = vmatprep.subr.bf16.mxu0 0
  %1223 = vmatpush1.bf16.msra.mxu0 0
  %1224 = vmatprep.subr.bf16.mxu0 0
  %1225 = vmatpush1.bf16.msra.mxu0 0
  %1226 = vmatprep.mubr.bf16.mxu0 0
  %1227 = vmatmul.mubr.bf16.gmra.mrb[0].mxu0 %v1069
  %v1228 = vpop.f32.mrb[0].mxu0
  %v1229 = vadd.f32 %v975, %v1228
  %v1230 = vpop.f32.mrb[0].mxu0
  %v1231 = vadd.f32 %v979, %v1230
  %v1232 = vpop.f32.mrb[0].mxu0
  %v1233 = vpop.f32.mrb[0].mxu0
  %1234 = vdwg.mxu0
  %v1235 = vsub.f32 0.0, %v1106
  %v1236 = vsub.f32 0.0, %v1108
  %v1237 = vsub.f32 0.0, %v1147
  %v1238 = vsub.f32 0.0, %v1149
  %v1239 = vsub.f32 0.0, %v1188
  %v1240 = vsub.f32 0.0, %v1190
  %v1241 = vsub.f32 0.0, %v1229
  %v1242 = vsub.f32 0.0, %v1231
  %v1243 = vmul.f32 %v1235, 1.442695
  %v1244 = vpow.pop %v1243
  %v1245 = vmul.f32 %v1236, 1.442695
  %v1246 = vpow.pop %v1245
  %v1247 = vmul.f32 %v1237, 1.442695
  %v1248 = vpow.pop %v1247
  %v1249 = vmul.f32 %v1238, 1.442695
  %v1250 = vpow.pop %v1249
  %v1251 = vmul.f32 %v1239, 1.442695
  %v1252 = vpow.pop %v1251
  %v1253 = vmul.f32 %v1240, 1.442695
  %v1254 = vpow.pop %v1253
  %v1255 = vmul.f32 %v1241, 1.442695
  %v1256 = vpow.pop %v1255
  %v1257 = vmul.f32 %v1242, 1.442695
  %v1258 = vpow.pop %v1257
  %v1259 = vadd.f32 %v1244, 1.0
  %v1260 = vadd.f32 %v1246, 1.0
  %v1261 = vadd.f32 %v1248, 1.0
  %v1262 = vadd.f32 %v1250, 1.0
  %v1263 = vadd.f32 %v1252, 1.0
  %v1264 = vadd.f32 %v1254, 1.0
  %v1265 = vadd.f32 %v1256, 1.0
  %v1266 = vadd.f32 %v1258, 1.0
  %v1267 = vrcp.pop %v1259
  %v1268 = vrcp.pop %v1260
  %v1269 = vrcp.pop %v1261
  %v1270 = vrcp.pop %v1262
  %v1271 = vrcp.pop %v1263
  %v1272 = vrcp.pop %v1264
  %v1273 = vrcp.pop %v1265
  %v1274 = vrcp.pop %v1266
  %1275 = vst [vmem:[%s9] sm:$0xff] %v1267
  %1276 = vst [vmem:[%s9 + $0x8] sm:$0xff] %v1268
  %1277 = vst [vmem:[%s9 + $0x10] sm:$0xff] %v1269
  %1278 = vst [vmem:[%s9 + $0x18] sm:$0xff] %v1270
  %1279 = vst [vmem:[%s9 + $0x20] sm:$0xff] %v1271
  %1280 = vst [vmem:[%s9 + $0x28] sm:$0xff] %v1272
  %1281 = vst [vmem:[%s9 + $0x30] sm:$0xff] %v1273
  %1282 = vst [vmem:[%s9 + $0x38] sm:$0xff] %v1274
  %1283 = vst [vmem:[%s10] sm:$0xff] %v815
  // Predicated region
  $region38: #{ae_forward.1} parent=0 // pred_check
    _
  $region39: #{ae_forward.1} parent=0 // pred_check_branch
    %1285 = sbr.rel (0) target = $region41
  $region40: #{ae_forward.1} parent=0 // pred_region
    _
  $region41: #{ae_forward.1} parent=0 // pred_fallthru
    _
  // Predicated region
  $region42: #{ae_forward.1} parent=0 // pred_check
    _
  $region43: #{ae_forward.1} parent=0 // pred_check_branch
    %1287 = sbr.rel (0) target = $region45
  $region44: #{ae_forward.1} parent=0 // pred_region
    _
  $region45: #{ae_forward.1} parent=0 // pred_fallthru
    _
  // Predicated region
  $region46: #{ae_forward.1} parent=0 // pred_check
    _
  $region47: #{ae_forward.1} parent=0 // pred_check_branch
    %1289 = sbr.rel (0) target = $region49
  $region48: #{ae_forward.1} parent=0 // pred_region
    _
  $region49: #{ae_forward.1} parent=0 // pred_fallthru
    _
  // Predicated region
  $region50: #{ae_forward.1} parent=0 // pred_check
    _
  $region51: #{ae_forward.1} parent=0 // pred_check_branch
    %1291 = sbr.rel (0) target = $region53
  $region52: #{ae_forward.1} parent=0 // pred_region
    _
  $region53: #{ae_forward.1} parent=0 // pred_fallthru
    _

</llo_original>
